<compile_context>
chip_gen: v7x
topology: tpu7x:2x2x1
jax: 0.10.0
libtpu: 0.0.40
codegen_flags: <defaults>
</compile_context>

<pallas_src>
import functools

import jax
import jax.numpy as jnp
from jax import lax
from jax.experimental import pallas as pl
from jax.experimental.pallas import tpu as pltpu

_EPS = 1e-12            # matches torch.nn.functional.normalize default eps
_EPS_SQ = _EPS * _EPS   # max(sqrt(ss), eps) == sqrt(max(ss, eps^2))


def _byol_loss_kernel(op1_ref, op2_ref, tp1_ref, tp2_ref, out_ref, *, tb, batch):
    i = pl.program_id(0)

    @pl.when(i == 0)
    def _():
        out_ref[...] = jnp.zeros_like(out_ref)

    # Keep inputs in native dtype through the DMA; upcast in-register only.
    op1 = op1_ref[...].astype(jnp.float32)
    op2 = op2_ref[...].astype(jnp.float32)
    tp1 = tp1_ref[...].astype(jnp.float32)  # detach(): no-op for forward pass
    tp2 = tp2_ref[...].astype(jnp.float32)

    # Fused normalization: per-row sums of squares + cross dot products.
    ss1 = jnp.sum(op1 * op1, axis=-1, keepdims=True)   # (TB, 1)
    ss2 = jnp.sum(op2 * op2, axis=-1, keepdims=True)
    ss3 = jnp.sum(tp1 * tp1, axis=-1, keepdims=True)
    ss4 = jnp.sum(tp2 * tp2, axis=-1, keepdims=True)
    d14 = jnp.sum(op1 * tp2, axis=-1, keepdims=True)
    d23 = jnp.sum(op2 * tp1, axis=-1, keepdims=True)

    # 1 / max(||x||, eps) == rsqrt(max(||x||^2, eps^2))  (EUP op, no divide)
    inv1 = lax.rsqrt(jnp.maximum(ss1, _EPS_SQ))
    inv2 = lax.rsqrt(jnp.maximum(ss2, _EPS_SQ))
    inv3 = lax.rsqrt(jnp.maximum(ss3, _EPS_SQ))
    inv4 = lax.rsqrt(jnp.maximum(ss4, _EPS_SQ))

    # 0.5*(2 - 2*c1) + 0.5*(2 - 2*c2) == 2 - (c1 + c2)
    loss_rows = 2.0 - (d14 * inv1 * inv4 + d23 * inv2 * inv3)   # (TB, 1)

    # Mask padded rows of a ragged last tile (trace-time check: free if exact).
    if batch % tb != 0:
        rows = i * tb + lax.broadcasted_iota(jnp.int32, loss_rows.shape, 0)
        loss_rows = jnp.where(rows < batch, loss_rows, 0.0)

    # Output block index is constant across the grid -> resident accumulator.
    out_ref[...] += jnp.sum(loss_rows, keepdims=True)

    @pl.when(i == pl.num_programs(0) - 1)
    def _():
        out_ref[...] = out_ref[...] * (1.0 / batch)


def _choose_block_rows(batch, dim, itemsize, vmem_budget_bytes=8 * 1024 * 1024):
    """Largest multiple-of-8 row tile whose 4-input double-buffered footprint
    fits the budget (conservative for v7x's 64 MiB physical VMEM as well)."""
    lane_dim = max(dim, 128)  # account for lane padding when D < 128
    rows = vmem_budget_bytes // (4 * 2 * lane_dim * itemsize)
    rows = max(8, min(2048, (rows // 8) * 8))
    if batch <= rows:
        return batch          # one tile covering the whole (small) batch
    return rows


def byol_loss(opred1, opred2, tproj1, tproj2):
    """Pallas implementation of BYOL_Loss.forward. Inputs: (B, D) each."""
    B, D = opred1.shape
    assert opred2.shape == (B, D) and tproj1.shape == (B, D) and tproj2.shape == (B, D)

    itemsize = jnp.dtype(opred1.dtype).itemsize
    tb = _choose_block_rows(B, D, itemsize)
    grid = (pl.cdiv(B, tb),)

    in_spec = pl.BlockSpec((tb, D), lambda i: (i, 0))
    kernel = functools.partial(_byol_loss_kernel, tb=tb, batch=B)

    out = pl.pallas_call(
        kernel,
        out_shape=jax.ShapeDtypeStruct((1, 1), jnp.float32),
        grid=grid,
        in_specs=[in_spec, in_spec, in_spec, in_spec],
        out_specs=pl.BlockSpec((1, 1), lambda i: (0, 0)),
        compiler_params=pltpu.CompilerParams(
            # Carried scalar accumulator -> reduction axis must be arbitrary.
            # TODO(synk): on v7x, emit per-tile partial sums with a "parallel"
            # axis to shard the grid across both TensorCores.
            dimension_semantics=("arbitrary",),
        ),
        cost_estimate=pl.CostEstimate(
            flops=12 * B * D,
            transcendentals=4 * B,
            bytes_accessed=4 * B * D * itemsize + 4,
        ),
    )(opred1, opred2, tproj1, tproj2)
    return out[0, 0]


def byol_loss_ref(opred1, opred2, tproj1, tproj2):
    """Pure-JAX reference matching the PyTorch module."""
    def l2n(x):
        n = jnp.sqrt(jnp.sum(x * x, axis=-1, keepdims=True))
        return x / jnp.maximum(n, _EPS)

    a, b = l2n(opred1), l2n(opred2)
    c, d = l2n(tproj1), l2n(tproj2)
    lp1 = 2.0 - 2.0 * jnp.sum(a * d, axis=-1)
    lp2 = 2.0 - 2.0 * jnp.sum(b * c, axis=-1)
    return jnp.mean(0.5 * lp1 + 0.5 * lp2)


if __name__ == "__main__":
    # BYOL_Loss has no parameters; deterministic small example inputs.
    key = jax.random.PRNGKey(0)
    k1, k2, k3, k4 = jax.random.split(key, 4)
    B, D = 8, 32  # batch, projection/prediction dim
    opred1 = jax.random.normal(k1, (B, D), dtype=jnp.float32)
    opred2 = jax.random.normal(k2, (B, D), dtype=jnp.float32)
    tproj1 = jax.random.normal(k3, (B, D), dtype=jnp.float32)
    tproj2 = jax.random.normal(k4, (B, D), dtype=jnp.float32)

    out = byol_loss(opred1, opred2, tproj1, tproj2)
    jax.block_until_ready(out)

    ref = byol_loss_ref(opred1, opred2, tproj1, tproj2)
    assert jnp.allclose(out, ref, atol=1e-5, rtol=1e-5), (out, ref)

    print("KERNEL_OK")
</pallas_src>

<mosaic_0001>
module attributes {stable_mosaic.version = 11 : i64} {
  func.func @_byol_loss_kernel(%arg0: i32, %arg1: memref<8x32xf32, #tpu.memory_space<vmem>>, %arg2: memref<8x32xf32, #tpu.memory_space<vmem>>, %arg3: memref<8x32xf32, #tpu.memory_space<vmem>>, %arg4: memref<8x32xf32, #tpu.memory_space<vmem>>, %arg5: memref<1x1xf32, #tpu.memory_space<vmem>>) attributes {dimension_semantics = [#tpu.dimension_semantics<arbitrary>], iteration_bounds = array<i64: 1>, scalar_prefetch = 0 : i64, scratch_operands = 0 : i64, tpu.core_type = #tpu.core_type<tc>, window_params = [{transform_indices = @transform_0, window_bounds = array<i64: 8, 32>}, {transform_indices = @transform_1, window_bounds = array<i64: 8, 32>}, {transform_indices = @transform_2, window_bounds = array<i64: 8, 32>}, {transform_indices = @transform_3, window_bounds = array<i64: 8, 32>}, {pipeline_mode = #tpu.pipeline_mode<synchronous>, transform_indices = @transform_4, window_bounds = array<i64: 1, 1>}]} {
    %c0_i32 = arith.constant 0 : i32
    %0 = arith.cmpi eq, %arg0, %c0_i32 : i32
    %1 = arith.extui %0 : i1 to i32
    %c0_i32_0 = arith.constant 0 : i32
    %2 = arith.cmpi ne, %1, %c0_i32_0 : i32
    scf.if %2 {
      %cst_25 = arith.constant 0.000000e+00 : f32
      %55 = vector.broadcast %cst_25 : f32 to vector<1x1xf32>
      %c0_26 = arith.constant 0 : index
      %c0_27 = arith.constant 0 : index
      %56 = vector.load %arg5[%c0_26, %c0_27] : memref<1x1xf32, #tpu.memory_space<vmem>>, vector<1x1xf32>
      tpu.vector_store %arg5[%c0_26, %c0_27], %55 {strides = array<i32>} : memref<1x1xf32, #tpu.memory_space<vmem>>, vector<1x1xf32>,
    } else {
    }
    %c0 = arith.constant 0 : index
    %c0_1 = arith.constant 0 : index
    %3 = vector.load %arg1[%c0, %c0_1] : memref<8x32xf32, #tpu.memory_space<vmem>>, vector<8x32xf32>
    %c0_2 = arith.constant 0 : index
    %c0_3 = arith.constant 0 : index
    %4 = vector.load %arg2[%c0_2, %c0_3] : memref<8x32xf32, #tpu.memory_space<vmem>>, vector<8x32xf32>
    %c0_4 = arith.constant 0 : index
    %c0_5 = arith.constant 0 : index
    %5 = vector.load %arg3[%c0_4, %c0_5] : memref<8x32xf32, #tpu.memory_space<vmem>>, vector<8x32xf32>
    %c0_6 = arith.constant 0 : index
    %c0_7 = arith.constant 0 : index
    %6 = vector.load %arg4[%c0_6, %c0_7] : memref<8x32xf32, #tpu.memory_space<vmem>>, vector<8x32xf32>
    %7 = arith.mulf %3, %3 : vector<8x32xf32>
    %cst = arith.constant dense<0.000000e+00> : vector<8xf32>
    %8 = vector.multi_reduction <add>, %7, %cst [1] : vector<8x32xf32> to vector<8xf32>
    %9 = vector.shape_cast %8 : vector<8xf32> to vector<8x1xf32>
    %10 = arith.mulf %4, %4 : vector<8x32xf32>
    %cst_8 = arith.constant dense<0.000000e+00> : vector<8xf32>
    %11 = vector.multi_reduction <add>, %10, %cst_8 [1] : vector<8x32xf32> to vector<8xf32>
    %12 = vector.shape_cast %11 : vector<8xf32> to vector<8x1xf32>
    %13 = arith.mulf %5, %5 : vector<8x32xf32>
    %cst_9 = arith.constant dense<0.000000e+00> : vector<8xf32>
    %14 = vector.multi_reduction <add>, %13, %cst_9 [1] : vector<8x32xf32> to vector<8xf32>
    %15 = vector.shape_cast %14 : vector<8xf32> to vector<8x1xf32>
    %16 = arith.mulf %6, %6 : vector<8x32xf32>
    %cst_10 = arith.constant dense<0.000000e+00> : vector<8xf32>
    %17 = vector.multi_reduction <add>, %16, %cst_10 [1] : vector<8x32xf32> to vector<8xf32>
    %18 = vector.shape_cast %17 : vector<8xf32> to vector<8x1xf32>
    %19 = arith.mulf %3, %6 : vector<8x32xf32>
    %cst_11 = arith.constant dense<0.000000e+00> : vector<8xf32>
    %20 = vector.multi_reduction <add>, %19, %cst_11 [1] : vector<8x32xf32> to vector<8xf32>
    %21 = vector.shape_cast %20 : vector<8xf32> to vector<8x1xf32>
    %22 = arith.mulf %4, %5 : vector<8x32xf32>
    %cst_12 = arith.constant dense<0.000000e+00> : vector<8xf32>
    %23 = vector.multi_reduction <add>, %22, %cst_12 [1] : vector<8x32xf32> to vector<8xf32>
    %24 = vector.shape_cast %23 : vector<8xf32> to vector<8x1xf32>
    %cst_13 = arith.constant 1.000000e-24 : f32
    %25 = vector.broadcast %cst_13 : f32 to vector<8x1xf32>
    %26 = arith.maximumf %9, %25 : vector<8x1xf32>
    %27 = math.rsqrt %26 : vector<8x1xf32>
    %cst_14 = arith.constant 1.000000e-24 : f32
    %28 = vector.broadcast %cst_14 : f32 to vector<8x1xf32>
    %29 = arith.maximumf %12, %28 : vector<8x1xf32>
    %30 = math.rsqrt %29 : vector<8x1xf32>
    %cst_15 = arith.constant 1.000000e-24 : f32
    %31 = vector.broadcast %cst_15 : f32 to vector<8x1xf32>
    %32 = arith.maximumf %15, %31 : vector<8x1xf32>
    %33 = math.rsqrt %32 : vector<8x1xf32>
    %cst_16 = arith.constant 1.000000e-24 : f32
    %34 = vector.broadcast %cst_16 : f32 to vector<8x1xf32>
    %35 = arith.maximumf %18, %34 : vector<8x1xf32>
    %36 = math.rsqrt %35 : vector<8x1xf32>
    %37 = arith.mulf %21, %27 : vector<8x1xf32>
    %38 = arith.mulf %37, %36 : vector<8x1xf32>
    %39 = arith.mulf %24, %30 : vector<8x1xf32>
    %40 = arith.mulf %39, %33 : vector<8x1xf32>
    %41 = arith.addf %38, %40 : vector<8x1xf32>
    %cst_17 = arith.constant 2.000000e+00 : f32
    %42 = vector.broadcast %cst_17 : f32 to vector<8x1xf32>
    %43 = arith.subf %42, %41 : vector<8x1xf32>
    %c0_18 = arith.constant 0 : index
    %c0_19 = arith.constant 0 : index
    %44 = vector.load %arg5[%c0_18, %c0_19] : memref<1x1xf32, #tpu.memory_space<vmem>>, vector<1x1xf32>
    %45 = vector.shape_cast %43 : vector<8x1xf32> to vector<1x8x1xf32>
    %cst_20 = arith.constant dense<0.000000e+00> : vector<1xf32>
    %46 = vector.multi_reduction <add>, %45, %cst_20 [1, 2] : vector<1x8x1xf32> to vector<1xf32>
    %47 = vector.shape_cast %46 : vector<1xf32> to vector<1x1x1xf32>
    %48 = vector.extract %47[0, 0, 0] : f32 from vector<1x1x1xf32>
    %49 = vector.broadcast %48 : f32 to vector<1x1xf32>
    %50 = arith.addf %44, %49 : vector<1x1xf32>
    %c0_21 = arith.constant 0 : index
    %c0_22 = arith.constant 0 : index
    %51 = vector.load %arg5[%c0_21, %c0_22] : memref<1x1xf32, #tpu.memory_space<vmem>>, vector<1x1xf32>
    tpu.vector_store %arg5[%c0_21, %c0_22], %50 {strides = array<i32>} : memref<1x1xf32, #tpu.memory_space<vmem>>, vector<1x1xf32>,
    %c0_i32_23 = arith.constant 0 : i32
    %52 = arith.cmpi eq, %arg0, %c0_i32_23 : i32
    %53 = arith.extui %52 : i1 to i32
    %c0_i32_24 = arith.constant 0 : i32
    %54 = arith.cmpi ne, %53, %c0_i32_24 : i32
    scf.if %54 {
      %c0_25 = arith.constant 0 : index
      %c0_26 = arith.constant 0 : index
      %55 = vector.load %arg5[%c0_25, %c0_26] : memref<1x1xf32, #tpu.memory_space<vmem>>, vector<1x1xf32>
      %cst_27 = arith.constant 1.250000e-01 : f32
      %56 = vector.broadcast %cst_27 : f32 to vector<1x1xf32>
      %57 = arith.mulf %55, %56 : vector<1x1xf32>
      %c0_28 = arith.constant 0 : index
      %c0_29 = arith.constant 0 : index
      %58 = vector.load %arg5[%c0_28, %c0_29] : memref<1x1xf32, #tpu.memory_space<vmem>>, vector<1x1xf32>
      tpu.vector_store %arg5[%c0_28, %c0_29], %57 {strides = array<i32>} : memref<1x1xf32, #tpu.memory_space<vmem>>, vector<1x1xf32>,
    } else {
    }
    return
  }
  func.func @transform_0(%arg0: i32) -> (i32, i32) {
    %c0_i32 = arith.constant 0 : i32
    %c0_i32_0 = arith.constant 0 : i32
    return %arg0, %c0_i32 : i32, i32
  }
  func.func @transform_1(%arg0: i32) -> (i32, i32) {
    %c0_i32 = arith.constant 0 : i32
    %c0_i32_0 = arith.constant 0 : i32
    return %arg0, %c0_i32 : i32, i32
  }
  func.func @transform_2(%arg0: i32) -> (i32, i32) {
    %c0_i32 = arith.constant 0 : i32
    %c0_i32_0 = arith.constant 0 : i32
    return %arg0, %c0_i32 : i32, i32
  }
  func.func @transform_3(%arg0: i32) -> (i32, i32) {
    %c0_i32 = arith.constant 0 : i32
    %c0_i32_0 = arith.constant 0 : i32
    return %arg0, %c0_i32 : i32, i32
  }
  func.func @transform_4(%arg0: i32) -> (i32, i32) {
    %c0_i32 = arith.constant 0 : i32
    %c0_i32_0 = arith.constant 0 : i32
    %c0_i32_1 = arith.constant 0 : i32
    return %c0_i32, %c0_i32_0 : i32, i32
  }
}

</mosaic_0001>

<llo_original>
// kernel: tpu_custom_call.1
$region0: #{tpu_custom_call.1}
  #allocation0 [shape = 'u32[]', space=smem, size = 0x4, offset = 0x4, fixed_abs, tag = 'smem constant byte address 0x4 - core index']
  #allocation1 [shape = 'u32[144,128]{1,0:T(1,128)}', space=vmem, size = 0x12000, scoped, tag = 'internal scratch']
  %s0 = inlined_call_operand.hbm [shape: f32[8,32], index: 0, kind: input, shape index: {}]
  %s1 = inlined_call_operand.hbm [shape: f32[8,32], index: 1, kind: input, shape index: {}]
  %s2 = inlined_call_operand.hbm [shape: f32[8,32], index: 2, kind: input, shape index: {}]
  %s3 = inlined_call_operand.vmem [shape: f32[8,32], index: 3, kind: input, shape index: {}]
  %s4 = inlined_call_operand.hbm [shape: f32[1,1], index: 4, kind: output, shape index: {}]
  %s5 = sld [smem:[#allocation0]]
  $region46: #{tpu_custom_call.1} parent=0
    _
  %s7 = ssub.s32 1, %s5
  %s8 = scalar_select 0, %s7, %s5
  $region1: #{tpu_custom_call.1} parent=0
    #allocation2 [shape = 'u8[4096]{0}', space=vmem, size = 0x1000, scoped, tag = 'input window, operand 0, single buffered']
    #allocation3 [shape = 's32[1]{0}', space=sflag, size = 0x4, scoped, tag = 'scoped memory for tpu_custom_call.1']
    #allocation4 [shape = 's32[1]{0}', space=sflag, size = 0x4, scoped, tag = 'scoped memory for tpu_custom_call.1']
    #allocation5 [shape = 'u8[4096]{0}', space=vmem, size = 0x1000, scoped, tag = 'input window, operand 1, single buffered']
    #allocation6 [shape = 's32[1]{0}', space=sflag, size = 0x4, scoped, tag = 'scoped memory for tpu_custom_call.1']
    #allocation7 [shape = 'u8[4096]{0}', space=vmem, size = 0x1000, scoped, tag = 'input window, operand 2, single buffered']
    #allocation8 [shape = 'u8[512]{0}', space=vmem, size = 0x400, scoped, tag = 'output window, operand 0, single buffered']
    %9 = vsyncpa [#allocation3], 0
    %10 = vsyncpa [#allocation6], 0
    %11 = vsyncpa [#allocation4], 0
    // Predicated region
    $region2: #{tpu_custom_call.1} parent=1 // pred_check
      _
    $region3: #{tpu_custom_call.1} parent=1 // pred_check_branch
      %13 = sbr.rel (0) target = $region5
    $region4: #{tpu_custom_call.1} parent=1 // pred_region
      %s15 = ssub.s32 128, 128
      %16 = vsyncadd [#allocation3], %s15
      %s18 = sshll.u32 [#allocation2], 4
      %s19 = int_to_ptr.vmem [resolvable:$true] %s18
      %21 = dma.hbm_to_vmem [thread:$0]  %s0, 128, %s19, [#allocation3]
    $region5: #{tpu_custom_call.1} parent=1 // pred_fallthru
      _
    // Predicated region
    $region6: #{tpu_custom_call.1} parent=1 // pred_check
      _
    $region7: #{tpu_custom_call.1} parent=1 // pred_check_branch
      %23 = sbr.rel (0) target = $region9
    $region8: #{tpu_custom_call.1} parent=1 // pred_region
      %s25 = ssub.s32 128, 128
      %26 = vsyncadd [#allocation6], %s25
      %s28 = sshll.u32 [#allocation5], 4
      %s29 = int_to_ptr.vmem [resolvable:$true] %s28
      %31 = dma.hbm_to_vmem [thread:$0]  %s1, 128, %s29, [#allocation6]
    $region9: #{tpu_custom_call.1} parent=1 // pred_fallthru
      _
    // Predicated region
    $region10: #{tpu_custom_call.1} parent=1 // pred_check
      _
    $region11: #{tpu_custom_call.1} parent=1 // pred_check_branch
      %33 = sbr.rel (0) target = $region13
    $region12: #{tpu_custom_call.1} parent=1 // pred_region
      %s35 = ssub.s32 128, 128
      %36 = vsyncadd [#allocation6], %s35
      %s38 = sshll.u32 [#allocation7], 4
      %s39 = int_to_ptr.vmem [resolvable:$true] %s38
      %41 = dma.hbm_to_vmem [thread:$0]  %s2, 128, %s39, [#allocation6]
    $region13: #{tpu_custom_call.1} parent=1 // pred_fallthru
      _
    // Predicated region
    $region14: #{tpu_custom_call.1} parent=1 // pred_check
      _
    $region15: #{tpu_custom_call.1} parent=1 // pred_check_branch
      %43 = sbr.rel (0) target = $region17
    $region16: #{tpu_custom_call.1} parent=1 // pred_region
      _
    $region17: #{tpu_custom_call.1} parent=1 // pred_fallthru
      _
    // Predicated region
    $region18: #{tpu_custom_call.1} parent=1 // pred_check
      _
    $region19: #{tpu_custom_call.1} parent=1 // pred_check_branch
      %45 = sbr.rel (0) target = $region21
    $region20: #{tpu_custom_call.1} parent=1 // pred_region
      %46 = dma.done [#allocation3], 128
    $region21: #{tpu_custom_call.1} parent=1 // pred_fallthru
      _
    // Predicated region
    $region22: #{tpu_custom_call.1} parent=1 // pred_check
      _
    $region23: #{tpu_custom_call.1} parent=1 // pred_check_branch
      %48 = sbr.rel (0) target = $region25
    $region24: #{tpu_custom_call.1} parent=1 // pred_region
      %49 = dma.done [#allocation6], 128
    $region25: #{tpu_custom_call.1} parent=1 // pred_fallthru
      _
    // Predicated region
    $region26: #{tpu_custom_call.1} parent=1 // pred_check
      _
    $region27: #{tpu_custom_call.1} parent=1 // pred_check_branch
      %51 = sbr.rel (0) target = $region29
    $region28: #{tpu_custom_call.1} parent=1 // pred_region
      %52 = dma.done [#allocation6], 128
    $region29: #{tpu_custom_call.1} parent=1 // pred_fallthru
      _
    %p53 = scmp.eq.s32.totalorder 0, 0
    // Predicated region
    $region30: #{tpu_custom_call.1} parent=1 // pred_check
      %p54 = pneg %p53
    $region31: #{tpu_custom_call.1} parent=1 // pred_check_branch
      %56 = sbr.rel (%p54) target = $region33
    $region32: #{tpu_custom_call.1} parent=1 // pred_region
      %vm57 = vcmask 0
      %58 = vst.msk [vmem:[#allocation8] sm:$0x1] %vm57, 0.0
    $region33: #{tpu_custom_call.1} parent=1 // pred_fallthru
      _
    %v59 = vld [vmem:[#allocation2] sm:$0xff]
    %v60 = vld [vmem:[#allocation5] sm:$0xff]
    %v61 = vld [vmem:[#allocation7] sm:$0xff]
    %v62 = vld [vmem:[%s3] sm:$0xff]
    %v63 = vmul.f32 %v59, %v59
    %vm64 = vcmask 261120
    %v65 = vsel %vm64, %v63, 0.0
    %66 = vadd.xlane.f32.xlu0 %v65
    %v67 = vpop.xlane.xlu0 %66
    %v68 = vmul.f32 %v60, %v60
    %v69 = vsel %vm64, %v68, 0.0
    %70 = vadd.xlane.f32.xlu0 %v69
    %v71 = vpop.xlane.xlu0 %70
    %v72 = vmul.f32 %v61, %v61
    %v73 = vsel %vm64, %v72, 0.0
    %74 = vadd.xlane.f32.xlu0 %v73
    %v75 = vpop.xlane.xlu0 %74
    %v76 = vmul.f32 %v62, %v62
    %v77 = vsel %vm64, %v76, 0.0
    %78 = vadd.xlane.f32.xlu0 %v77
    %v79 = vpop.xlane.xlu0 %78
    %v80 = vmul.f32 %v59, %v62
    %v81 = vsel %vm64, %v80, 0.0
    %82 = vadd.xlane.f32.xlu0 %v81
    %v83 = vpop.xlane.xlu0 %82
    %v84 = vmul.f32 %v60, %v61
    %v85 = vsel %vm64, %v84, 0.0
    %86 = vadd.xlane.f32.xlu0 %v85
    %v87 = vpop.xlane.xlu0 %86
    %v88 = vmax.f32 %v67, 1e-24
    %v89 = vrsqrt.pop %v88
    %v90 = vmax.f32 %v71, 1e-24
    %v91 = vrsqrt.pop %v90
    %v92 = vmax.f32 %v75, 1e-24
    %v93 = vrsqrt.pop %v92
    %v94 = vmax.f32 %v79, 1e-24
    %v95 = vrsqrt.pop %v94
    %v96 = vmul.f32 %v83, %v89
    %v97 = vmul.f32 %v96, %v95
    %v98 = vmul.f32 %v87, %v91
    %v99 = vmul.f32 %v98, %v93
    %v100 = vadd.f32 %v97, %v99
    %v101 = vsub.f32 2.0, %v100
    %v102 = vld [vmem:[#allocation8] sm:$0x1]
    %vm103 = vcmask 7168
    %v104 = vsel %vm103, %v101, 0.0
    %105 = vadd.xlane.f32.xlu0 %v104
    %v106 = vpop.xlane.xlu0 %105
    %v107 = vrot.slane %v106, 4
    %v108 = vadd.f32 %v106, %v107
    %v109 = vrot.slane %v108, 2
    %v110 = vadd.f32 %v108, %v109
    %v111 = vrot.slane %v110, 1
    %v112 = vadd.f32 %v110, %v111
    %s113 = vtos %v112
    %v114 = vstv %s113
    %v115 = vadd.f32 %v102, %v114
    %vm116 = vcmask 0
    %117 = vst.msk [vmem:[#allocation8] sm:$0x1] %vm116, %v115
    // Predicated region
    $region34: #{tpu_custom_call.1} parent=1 // pred_check
      %p118 = pneg %p53
    $region35: #{tpu_custom_call.1} parent=1 // pred_check_branch
      %120 = sbr.rel (%p118) target = $region37
    $region36: #{tpu_custom_call.1} parent=1 // pred_region
      %v121 = vld [vmem:[#allocation8] sm:$0x1]
      %v122 = vmul.f32 %v121, 0.125
      %123 = vst.msk [vmem:[#allocation8] sm:$0x1] %vm116, %v122
    $region37: #{tpu_custom_call.1} parent=1 // pred_fallthru
      _
    // Predicated region
    $region38: #{tpu_custom_call.1} parent=1 // pred_check
      _
    $region39: #{tpu_custom_call.1} parent=1 // pred_check_branch
      %125 = sbr.rel (0) target = $region41
    $region40: #{tpu_custom_call.1} parent=1 // pred_region
      %s127 = ssub.s32 16, 16
      %128 = vsyncadd [#allocation4], %s127
      %s130 = sshll.u32 [#allocation8], 4
      %s131 = int_to_ptr.vmem [resolvable:$true] %s130
      %133 = dma.vmem_to_hbm [thread:$0]  %s131, 16, %s4, [#allocation4]
    $region41: #{tpu_custom_call.1} parent=1 // pred_fallthru
      _
    // Predicated region
    $region42: #{tpu_custom_call.1} parent=1 // pred_check
      _
    $region43: #{tpu_custom_call.1} parent=1 // pred_check_branch
      %135 = sbr.rel (0) target = $region45
    $region44: #{tpu_custom_call.1} parent=1 // pred_region
      %136 = dma.done [#allocation4], 16
    $region45: #{tpu_custom_call.1} parent=1 // pred_fallthru
      _
    %137 = vsyncpa [#allocation3], 1
    %138 = vsyncpa [#allocation6], 1
    %139 = vsyncpa [#allocation4], 1

</llo_original>
